<compile_context>
chip_gen: v7x
topology: tpu7x:2x2x1
jax: 0.10.0
libtpu: 0.0.40
codegen_flags: <defaults>
</compile_context>

<pallas_src>
import jax
import jax.numpy as jnp
from jax.experimental import pallas as pl
from jax.experimental.pallas import tpu as pltpu

# ----------------------------- model config ---------------------------------
BATCH = 2
SEQ = 128
DIM = 128         # model dim      (multiple of 128 -> lane-dense)
HIDDEN = 256      # mlp hidden dim (multiple of the hidden tile)
EPS = 1e-5        # torch nn.LayerNorm default

TM = 128          # row tile (tokens per grid step)
TH = 128          # hidden (K) tile


# ------------------------------- kernel --------------------------------------
def feedforward_kernel(x_ref, gbb_ref, b1_ref, w1_ref, w2_ref, o_ref,
                       xn_ref, acc_ref):
    """One (TM, DIM) row tile x one TH-slice of the hidden dim.

    Grid axis 0 = row tiles ("parallel"), axis 1 = hidden tiles ("arbitrary").
    The normalized activation and the f32 output accumulator live in VMEM
    scratch and stay resident across the hidden axis.
    """
    hi = pl.program_id(1)

    # ---- first hidden step: LayerNorm (one pass) + accumulator init ----------
    @pl.when(hi == 0)
    def _():
        x = x_ref[...]                                   # (TM, D) f32
        gamma = gbb_ref[0:1, :]                          # (1, D)
        beta = gbb_ref[1:2, :]                           # (1, D)
        inv_d = 1.0 / x.shape[-1]
        mean = jnp.sum(x, axis=-1, keepdims=True) * inv_d
        ex2 = jnp.sum(x * x, axis=-1, keepdims=True) * inv_d
        var = ex2 - mean * mean                          # biased var (torch)
        xn = (x - mean) * jax.lax.rsqrt(var + EPS) * gamma + beta
        xn_ref[...] = xn.astype(xn_ref.dtype)            # bf16 for the MXU
        acc_ref[...] = jnp.zeros_like(acc_ref)

    # ---- Linear(dim -> TH) + GELU (tanh, EUP) + partial Linear(TH -> dim) ----
    h = jnp.dot(xn_ref[...], w1_ref[...],                # bf16 x bf16 -> f32
                preferred_element_type=jnp.float32) + b1_ref[...]
    h = jax.nn.gelu(h, approximate=True)                 # f32 on VPU/EUP
    acc_ref[...] += jnp.dot(h.astype(jnp.bfloat16), w2_ref[...],
                            preferred_element_type=jnp.float32)

    # ---- last hidden step: add b2 and store lane-dense output ----------------
    @pl.when(hi == pl.num_programs(1) - 1)
    def _():
        b2 = gbb_ref[2:3, :]                             # (1, D)
        # Dropout(p=0.0) is identity at inference; nothing to do.
        o_ref[...] = (acc_ref[...] + b2).astype(o_ref.dtype)


# ----------------------------- pallas wrapper ---------------------------------
def feedforward(x, gamma, beta, w1, b1, w2, b2, *, tm=TM, th=TH):
    B, N, D = x.shape
    H = w1.shape[1]
    assert D % 128 == 0, "DIM must be a multiple of 128 (lane-dense layout)"
    assert H % th == 0, "HIDDEN must be a multiple of the hidden tile"

    M = B * N
    x2 = x.reshape(M, D)
    # Pad rows so M is a multiple of the row tile (padded rows are discarded).
    Mp = pl.cdiv(M, tm) * tm
    if Mp != M:
        x2 = jnp.pad(x2, ((0, Mp - M), (0, 0)))

    # Pack the three (1, D) vectors into a single (3, D) input -> one tiny DMA.
    gbb = jnp.concatenate([gamma, beta, b2], axis=0)           # (3, D) f32
    # bf16 MXU operands: halve weight DMA bytes / VMEM; accumulate in f32.
    w1_bf = w1.astype(jnp.bfloat16)
    w2_bf = w2.astype(jnp.bfloat16)

    grid = (Mp // tm, H // th)

    # Advisory cost estimate so XLA schedules the custom call sensibly.
    cost = pl.CostEstimate(
        flops=4 * Mp * D * H,                # two matmuls
        transcendentals=Mp * H,              # tanh in GELU
        bytes_accessed=(x2.size * 4 + w1_bf.size * 2 + w2_bf.size * 2
                        + b1.size * 4 + gbb.size * 4 + Mp * D * 4),
    )

    out = pl.pallas_call(
        feedforward_kernel,
        out_shape=jax.ShapeDtypeStruct((Mp, D), x.dtype),
        grid_spec=pltpu.PrefetchScalarGridSpec(
            num_scalar_prefetch=0,
            grid=grid,
            in_specs=[
                # (TM, D) row tile of the activation; constant across hidden axis.
                pl.BlockSpec((tm, D), lambda i, h: (i, 0)),
                # packed [gamma; beta; b2] -- single resident block.
                pl.BlockSpec((3, D), lambda i, h: (0, 0)),
                # b1 sliced along the hidden axis.
                pl.BlockSpec((1, th), lambda i, h: (0, h)),
                # W1 (D, H): full D rows, TH columns per step.
                pl.BlockSpec((D, th), lambda i, h: (0, h)),
                # W2 (H, D): TH rows, full D columns per step.
                pl.BlockSpec((th, D), lambda i, h: (h, 0)),
            ],
            # Output block constant across the hidden axis -> accumulator pattern.
            out_specs=pl.BlockSpec((tm, D), lambda i, h: (i, 0)),
            scratch_shapes=[
                pltpu.VMEM((tm, D), jnp.bfloat16),   # normalized activation
                pltpu.VMEM((tm, D), jnp.float32),    # f32 output accumulator
            ],
        ),
        compiler_params=pltpu.CompilerParams(
            # rows are independent (2 TCs on v7x); hidden axis is a reduction.
            dimension_semantics=("parallel", "arbitrary"),
            # Tiny footprint here; for real sizes re-derive TM/TH per generation
            # (v7x: 64 MiB physical VMEM -> roughly half the v6e K-tile).
            vmem_limit_bytes=32 * 1024 * 1024,
        ),
        cost_estimate=cost,
    )(x2, gbb, b1, w1_bf, w2_bf)

    return out[:M].reshape(B, N, D)


# ------------------------------ parameters -----------------------------------
def init_params(key):
    ks = jax.random.split(key, 6)
    return {
        "ln_g": 1.0 + 0.01 * jax.random.normal(ks[0], (1, DIM), jnp.float32),
        "ln_b": 0.01 * jax.random.normal(ks[1], (1, DIM), jnp.float32),
        "w1": 0.05 * jax.random.normal(ks[2], (DIM, HIDDEN), jnp.float32),
        "b1": 0.01 * jax.random.normal(ks[3], (1, HIDDEN), jnp.float32),
        "w2": 0.05 * jax.random.normal(ks[4], (HIDDEN, DIM), jnp.float32),
        "b2": 0.01 * jax.random.normal(ks[5], (1, DIM), jnp.float32),
    }


# --------------------------- pure-JAX reference -------------------------------
def feedforward_ref(x, p):
    hp = jax.lax.Precision.HIGHEST
    mean = jnp.mean(x, axis=-1, keepdims=True)
    var = jnp.mean((x - mean) ** 2, axis=-1, keepdims=True)
    xn = (x - mean) * jax.lax.rsqrt(var + EPS) * p["ln_g"] + p["ln_b"]
    h = jnp.einsum("bnd,dh->bnh", xn, p["w1"], precision=hp) + p["b1"]
    h = jax.nn.gelu(h, approximate=False)     # torch nn.GELU default (exact)
    return jnp.einsum("bnh,hd->bnd", h, p["w2"], precision=hp) + p["b2"]


# ---------------------------------- main --------------------------------------
if __name__ == "__main__":
    key = jax.random.PRNGKey(0)
    key, xkey, pkey = jax.random.split(key, 3)
    x = jax.random.normal(xkey, (BATCH, SEQ, DIM), jnp.float32)
    params = init_params(pkey)

    out = feedforward(x, params["ln_g"], params["ln_b"],
                      params["w1"], params["b1"], params["w2"], params["b2"])
    out = jax.block_until_ready(out)

    ref = feedforward_ref(x, params)
    assert out.shape == (BATCH, SEQ, DIM)
    # Loose tolerance covers bf16 MXU operands + tanh-GELU vs exact erf ref.
    assert jnp.allclose(out, ref, rtol=2e-2, atol=2e-2), (
        float(jnp.max(jnp.abs(out - ref))))

    print("KERNEL_OK")
</pallas_src>

<mosaic_0001>
module attributes {stable_mosaic.version = 11 : i64} {
  func.func @feedforward_kernel(%arg0: i32, %arg1: i32, %arg2: memref<128x128xf32, #tpu.memory_space<vmem>>, %arg3: memref<3x128xf32, #tpu.memory_space<vmem>>, %arg4: memref<1x128xf32, #tpu.memory_space<vmem>>, %arg5: memref<128x128xbf16, #tpu.memory_space<vmem>>, %arg6: memref<128x128xbf16, #tpu.memory_space<vmem>>, %arg7: memref<128x128xf32, #tpu.memory_space<vmem>>, %arg8: memref<128x128xbf16, #tpu.memory_space<vmem>>, %arg9: memref<128x128xf32, #tpu.memory_space<vmem>>) attributes {dimension_semantics = [#tpu.dimension_semantics<parallel>, #tpu.dimension_semantics<arbitrary>], iteration_bounds = array<i64: 2, 2>, scalar_prefetch = 0 : i64, scratch_operands = 2 : i64, tpu.core_type = #tpu.core_type<tc>, window_params = [{transform_indices = @transform_0, window_bounds = array<i64: 128, 128>}, {pipeline_mode = #tpu.pipeline_mode<synchronous>, transform_indices = @transform_1, window_bounds = array<i64: 3, 128>}, {transform_indices = @transform_2, window_bounds = array<i64: 1, 128>}, {transform_indices = @transform_3, window_bounds = array<i64: 128, 128>}, {transform_indices = @transform_4, window_bounds = array<i64: 128, 128>}, {transform_indices = @transform_5, window_bounds = array<i64: 128, 128>}]} {
    %c0_i32 = arith.constant 0 : i32
    %0 = arith.cmpi eq, %arg1, %c0_i32 : i32
    %1 = arith.extui %0 : i1 to i32
    %c0_i32_0 = arith.constant 0 : i32
    %2 = arith.cmpi ne, %1, %c0_i32_0 : i32
    scf.if %2 {
      %c0_18 = arith.constant 0 : index
      %c0_19 = arith.constant 0 : index
      %31 = vector.load %arg2[%c0_18, %c0_19] : memref<128x128xf32, #tpu.memory_space<vmem>>, vector<128x128xf32>
      %c0_20 = arith.constant 0 : index
      %c0_21 = arith.constant 0 : index
      %32 = vector.load %arg3[%c0_20, %c0_21] : memref<3x128xf32, #tpu.memory_space<vmem>>, vector<1x128xf32>
      %c1 = arith.constant 1 : index
      %c0_22 = arith.constant 0 : index
      %33 = vector.load %arg3[%c1, %c0_22] : memref<3x128xf32, #tpu.memory_space<vmem>>, vector<1x128xf32>
      %cst_23 = arith.constant dense<0.000000e+00> : vector<128xf32>
      %34 = vector.multi_reduction <add>, %31, %cst_23 [1] : vector<128x128xf32> to vector<128xf32>
      %35 = vector.shape_cast %34 : vector<128xf32> to vector<128x1xf32>
      %cst_24 = arith.constant 7.812500e-03 : f32
      %36 = vector.broadcast %cst_24 : f32 to vector<128x1xf32>
      %37 = arith.mulf %35, %36 : vector<128x1xf32>
      %38 = arith.mulf %31, %31 : vector<128x128xf32>
      %cst_25 = arith.constant dense<0.000000e+00> : vector<128xf32>
      %39 = vector.multi_reduction <add>, %38, %cst_25 [1] : vector<128x128xf32> to vector<128xf32>
      %40 = vector.shape_cast %39 : vector<128xf32> to vector<128x1xf32>
      %cst_26 = arith.constant 7.812500e-03 : f32
      %41 = vector.broadcast %cst_26 : f32 to vector<128x1xf32>
      %42 = arith.mulf %40, %41 : vector<128x1xf32>
      %43 = arith.mulf %37, %37 : vector<128x1xf32>
      %44 = arith.subf %42, %43 : vector<128x1xf32>
      %45 = vector.broadcast %37 : vector<128x1xf32> to vector<128x128xf32>
      %46 = arith.subf %31, %45 : vector<128x128xf32>
      %cst_27 = arith.constant 9.99999974E-6 : f32
      %47 = vector.broadcast %cst_27 : f32 to vector<128x1xf32>
      %48 = arith.addf %44, %47 : vector<128x1xf32>
      %49 = math.rsqrt %48 : vector<128x1xf32>
      %50 = vector.broadcast %49 : vector<128x1xf32> to vector<128x128xf32>
      %51 = arith.mulf %46, %50 : vector<128x128xf32>
      %52 = vector.broadcast %32 : vector<1x128xf32> to vector<128x128xf32>
      %53 = arith.mulf %51, %52 : vector<128x128xf32>
      %54 = vector.broadcast %33 : vector<1x128xf32> to vector<128x128xf32>
      %55 = arith.addf %53, %54 : vector<128x128xf32>
      %56 = arith.truncf %55 : vector<128x128xf32> to vector<128x128xbf16>
      %c0_28 = arith.constant 0 : index
      %c0_29 = arith.constant 0 : index
      %57 = vector.load %arg8[%c0_28, %c0_29] : memref<128x128xbf16, #tpu.memory_space<vmem>>, vector<128x128xbf16>
      tpu.vector_store %arg8[%c0_28, %c0_29], %56 {strides = array<i32>} : memref<128x128xbf16, #tpu.memory_space<vmem>>, vector<128x128xbf16>,
      %cst_30 = arith.constant 0.000000e+00 : f32
      %58 = vector.broadcast %cst_30 : f32 to vector<128x128xf32>
      %c0_31 = arith.constant 0 : index
      %c0_32 = arith.constant 0 : index
      %59 = vector.load %arg9[%c0_31, %c0_32] : memref<128x128xf32, #tpu.memory_space<vmem>>, vector<128x128xf32>
      tpu.vector_store %arg9[%c0_31, %c0_32], %58 {strides = array<i32>} : memref<128x128xf32, #tpu.memory_space<vmem>>, vector<128x128xf32>,
    } else {
    }
    %c0 = arith.constant 0 : index
    %c0_1 = arith.constant 0 : index
    %3 = vector.load %arg8[%c0, %c0_1] : memref<128x128xbf16, #tpu.memory_space<vmem>>, vector<128x128xbf16>
    %c0_2 = arith.constant 0 : index
    %c0_3 = arith.constant 0 : index
    %4 = vector.load %arg5[%c0_2, %c0_3] : memref<128x128xbf16, #tpu.memory_space<vmem>>, vector<128x128xbf16>
    %cst = arith.constant dense<0.000000e+00> : vector<128x128xf32>
    %5 = tpu.matmul %3, %4, %cst {dimension_numbers = #tpu.dot_dimension_numbers<[1], [0], [0], [1], [0, 0, 1, 1], [], []>} : vector<128x128xbf16>, vector<128x128xbf16>, vector<128x128xf32> -> vector<128x128xf32>
    %c0_4 = arith.constant 0 : index
    %c0_5 = arith.constant 0 : index
    %6 = vector.load %arg4[%c0_4, %c0_5] : memref<1x128xf32, #tpu.memory_space<vmem>>, vector<1x128xf32>
    %7 = vector.broadcast %6 : vector<1x128xf32> to vector<128x128xf32>
    %8 = arith.addf %5, %7 : vector<128x128xf32>
    %9 = arith.mulf %8, %8 : vector<128x128xf32>
    %10 = arith.mulf %8, %9 : vector<128x128xf32>
    %cst_6 = arith.constant 4.471500e-02 : f32
    %11 = vector.broadcast %cst_6 : f32 to vector<128x128xf32>
    %12 = arith.mulf %11, %10 : vector<128x128xf32>
    %13 = arith.addf %8, %12 : vector<128x128xf32>
    %cst_7 = arith.constant 0.797884583 : f32
    %14 = vector.broadcast %cst_7 : f32 to vector<128x128xf32>
    %15 = arith.mulf %14, %13 : vector<128x128xf32>
    %16 = math.tanh %15 : vector<128x128xf32>
    %cst_8 = arith.constant 1.000000e+00 : f32
    %17 = vector.broadcast %cst_8 : f32 to vector<128x128xf32>
    %18 = arith.addf %17, %16 : vector<128x128xf32>
    %cst_9 = arith.constant 5.000000e-01 : f32
    %19 = vector.broadcast %cst_9 : f32 to vector<128x128xf32>
    %20 = arith.mulf %19, %18 : vector<128x128xf32>
    %21 = arith.mulf %8, %20 : vector<128x128xf32>
    %c0_10 = arith.constant 0 : index
    %c0_11 = arith.constant 0 : index
    %22 = vector.load %arg9[%c0_10, %c0_11] : memref<128x128xf32, #tpu.memory_space<vmem>>, vector<128x128xf32>
    %23 = arith.truncf %21 : vector<128x128xf32> to vector<128x128xbf16>
    %c0_12 = arith.constant 0 : index
    %c0_13 = arith.constant 0 : index
    %24 = vector.load %arg6[%c0_12, %c0_13] : memref<128x128xbf16, #tpu.memory_space<vmem>>, vector<128x128xbf16>
    %cst_14 = arith.constant dense<0.000000e+00> : vector<128x128xf32>
    %25 = tpu.matmul %23, %24, %cst_14 {dimension_numbers = #tpu.dot_dimension_numbers<[1], [0], [0], [1], [0, 0, 1, 1], [], []>} : vector<128x128xbf16>, vector<128x128xbf16>, vector<128x128xf32> -> vector<128x128xf32>
    %26 = arith.addf %22, %25 : vector<128x128xf32>
    %c0_15 = arith.constant 0 : index
    %c0_16 = arith.constant 0 : index
    %27 = vector.load %arg9[%c0_15, %c0_16] : memref<128x128xf32, #tpu.memory_space<vmem>>, vector<128x128xf32>
    tpu.vector_store %arg9[%c0_15, %c0_16], %26 {strides = array<i32>} : memref<128x128xf32, #tpu.memory_space<vmem>>, vector<128x128xf32>,
    %c1_i32 = arith.constant 1 : i32
    %28 = arith.cmpi eq, %arg1, %c1_i32 : i32
    %29 = arith.extui %28 : i1 to i32
    %c0_i32_17 = arith.constant 0 : i32
    %30 = arith.cmpi ne, %29, %c0_i32_17 : i32
    scf.if %30 {
      %c2 = arith.constant 2 : index
      %c0_18 = arith.constant 0 : index
      %31 = vector.load %arg3[%c2, %c0_18] : memref<3x128xf32, #tpu.memory_space<vmem>>, vector<1x128xf32>
      %c0_19 = arith.constant 0 : index
      %c0_20 = arith.constant 0 : index
      %32 = vector.load %arg9[%c0_19, %c0_20] : memref<128x128xf32, #tpu.memory_space<vmem>>, vector<128x128xf32>
      %33 = vector.broadcast %31 : vector<1x128xf32> to vector<128x128xf32>
      %34 = arith.addf %32, %33 : vector<128x128xf32>
      %c0_21 = arith.constant 0 : index
      %c0_22 = arith.constant 0 : index
      %35 = vector.load %arg7[%c0_21, %c0_22] : memref<128x128xf32, #tpu.memory_space<vmem>>, vector<128x128xf32>
      tpu.vector_store %arg7[%c0_21, %c0_22], %34 {strides = array<i32>} : memref<128x128xf32, #tpu.memory_space<vmem>>, vector<128x128xf32>,
    } else {
    }
    return
  }
  func.func @transform_0(%arg0: i32, %arg1: i32) -> (i32, i32) {
    %c0_i32 = arith.constant 0 : i32
    %c0_i32_0 = arith.constant 0 : i32
    return %arg0, %c0_i32 : i32, i32
  }
  func.func @transform_1(%arg0: i32, %arg1: i32) -> (i32, i32) {
    %c0_i32 = arith.constant 0 : i32
    %c0_i32_0 = arith.constant 0 : i32
    %c0_i32_1 = arith.constant 0 : i32
    return %c0_i32, %c0_i32_0 : i32, i32
  }
  func.func @transform_2(%arg0: i32, %arg1: i32) -> (i32, i32) {
    %c0_i32 = arith.constant 0 : i32
    %c0_i32_0 = arith.constant 0 : i32
    return %c0_i32, %arg1 : i32, i32
  }
  func.func @transform_3(%arg0: i32, %arg1: i32) -> (i32, i32) {
    %c0_i32 = arith.constant 0 : i32
    %c0_i32_0 = arith.constant 0 : i32
    return %c0_i32, %arg1 : i32, i32
  }
  func.func @transform_4(%arg0: i32, %arg1: i32) -> (i32, i32) {
    %c0_i32 = arith.constant 0 : i32
    %c0_i32_0 = arith.constant 0 : i32
    return %arg1, %c0_i32 : i32, i32
  }
  func.func @transform_5(%arg0: i32, %arg1: i32) -> (i32, i32) {
    %c0_i32 = arith.constant 0 : i32
    %c0_i32_0 = arith.constant 0 : i32
    return %arg0, %c0_i32 : i32, i32
  }
}

</mosaic_0001>

<llo_original>
// kernel: tpu_custom_call.1
$region0: #{tpu_custom_call.1}
  #allocation0 [shape = 'u32[]', space=smem, size = 0x4, offset = 0x4, fixed_abs, tag = 'smem constant byte address 0x4 - core index']
  #allocation1 [shape = 'u32[144,128]{1,0:T(1,128)}', space=vmem, size = 0x12000, scoped, tag = 'internal scratch']
  #allocation2 [shape = 'bf16[128,128]{1,0:T(16,128)(2,1)}', space=vmem, size = 0x8000, scoped, tag = 'scratch operand']
  #allocation3 [shape = 'f32[128,128]{1,0:T(8,128)}', space=vmem, size = 0x10000, scoped, tag = 'scratch operand']
  %s0 = inlined_call_operand.hbm [shape: f32[256,128], index: 0, kind: input, shape index: {}]
  %s1 = inlined_call_operand.hbm [shape: f32[3,128], index: 1, kind: input, shape index: {}]
  %s2 = inlined_call_operand.vmem [shape: f32[1,256], index: 2, kind: input, shape index: {}]
  %s3 = inlined_call_operand.hbm [shape: bf16[128,256], index: 3, kind: input, shape index: {}]
  %s4 = inlined_call_operand.hbm [shape: bf16[256,128], index: 4, kind: input, shape index: {}]
  %s5 = inlined_call_operand.hbm [shape: f32[256,128], index: 5, kind: output, shape index: {}]
  %s6 = sld [smem:[#allocation0]]
  $region77: #{tpu_custom_call.1} parent=0
    _
  %s8 = ssub.s32 1, %s6
  %s9 = scalar_select 0, %s8, %s6
  $region1: #{tpu_custom_call.1} parent=0
    #allocation4 [shape = 'u8[131072]{0}', space=vmem, size = 0x20000, scoped, tag = 'input window, operand 0']
    #allocation5 [shape = 's32[2]{0}', space=sflag, size = 0x8, scoped, tag = 'scoped memory for tpu_custom_call.1']
    #allocation6 [shape = 's32[2]{0}', space=sflag, size = 0x8, scoped, tag = 'scoped memory for tpu_custom_call.1']
    #allocation7 [shape = 'u8[2048]{0}', space=vmem, size = 0x800, scoped, tag = 'input window, operand 1, single buffered']
    #allocation8 [shape = 's32[1]{0}', space=sflag, size = 0x4, scoped, tag = 'scoped memory for tpu_custom_call.1']
    #allocation9 [shape = 'u8[65536]{0}', space=vmem, size = 0x10000, scoped, tag = 'input window, operand 3']
    #allocation10 [shape = 'u8[65536]{0}', space=vmem, size = 0x10000, scoped, tag = 'input window, operand 4']
    #allocation11 [shape = 'u8[131072]{0}', space=vmem, size = 0x20000, scoped, tag = 'output window, operand 0']
    %10 = vsyncpa [#allocation5], 0
    %s11 = scalar_lea.sflag [#allocation5], 1
    %12 = vsyncpa %s11, 0
    %13 = vsyncpa [#allocation8], 0
    %14 = vsyncpa [#allocation6], 0
    %s15 = scalar_lea.sflag [#allocation6], 1
    %16 = vsyncpa %s15, 0
    loop: start=0, step=1, limit=6
    $region2: #{tpu_custom_call.1} parent=1 // loop_pre_header
      _
    $region3: #{tpu_custom_call.1} parent=1 // loop_header
      %s18 = sphi 0, %s22
      %p19 = scmp.ge.s32.totalorder %s18, 6
      %s25 = sphi 0, %s37
      %s26 = sphi 0, %s33
      %s27 = sphi 0, %s25
      %s28 = sphi 0, %s26
      %s29 = sphi 0, %s27
      %s30 = sphi 0, %s28
      %s40 = sphi 0, %s42
      %s43 = sphi 0, %s40
      %s44 = sphi 0, %s43
      %s60 = sphi 0, %s44
      %s64 = sphi 0, %s64
      %s66 = sphi 0, %s64
      %s67 = sphi 0, %s66
      %s81 = sphi 0, %s67
      %s87 = sphi 0, %s89
      %s90 = sphi 0, %s87
      %s91 = sphi 0, %s90
      %s107 = sphi 0, %s91
      %s113 = sphi 0, %s115
      %s116 = sphi 0, %s113
      %s117 = sphi 0, %s116
      %s133 = sphi 0, %s117
      %s139 = sphi 0, %s141
      %s142 = sphi 0, %s139
      %s143 = sphi 0, %s142
      %s159 = sphi 0, %s143
      %s165 = sphi 0, %s167
      %s168 = sphi 0, %s165
      %s169 = sphi 0, %s168
      %s185 = sphi 0, %s169
    $region4: #{tpu_custom_call.1} parent=1 // loop_header_branch
      %21 = sbr.rel (%p19) target = $region8
    $region5: #{tpu_custom_call.1} parent=1 // loop_body
      %s23 = ssub.s32 %s18, 1
      %s24 = ssub.s32 %s18, 2
      %s31 = sadd.s32 1, %s26
      %p32 = scmp.ge.s32.totalorder %s31, 2
      %s33 = scalar_select %p32, 0, %s31
      %s34 = sadd.s32 1, %s25
      %s35 = scalar_select %p32, %s34, %s25
      %p36 = scmp.ge.s32.totalorder %s35, 2
      %s37 = scalar_select %p36, 0, %s35
      %s38 = ssub.s32 %s25, %s37
      %p39 = scmp.eq.s32.totalorder %s38, 0
      %s41 = sadd.s32 %s40, 1
      %s42 = scalar_select %p39, %s40, %s41
      %p45 = pneg %p39
      %p46 = scmp.eq.s32.totalorder %s18, 3
      %p47 = por %p45, %p46
      %p48 = scmp.ne.s32.totalorder %s40, %s43
      %p49 = scmp.eq.s32.totalorder %s18, 0
      %p50 = por %p48, %p49
      %p51 = scmp.ne.s32.totalorder %s40, %s43
      %p52 = scmp.eq.s32.totalorder %s23, 3
      %p53 = por %p51, %p52
      %p54 = scmp.ne.s32.totalorder %s43, %s44
      %p55 = scmp.eq.s32.totalorder %s23, 0
      %p56 = por %p54, %p55
      %p57 = scmp.ne.s32.totalorder %s43, %s44
      %p58 = scmp.eq.s32.totalorder %s24, 3
      %p59 = por %p57, %p58
      %p61 = scmp.ne.s32.totalorder %s44, %s60
      %p62 = scmp.eq.s32.totalorder %s24, 0
      %p63 = por %p61, %p62
      %s65 = sadd.s32 %s64, 1
      %p68 = scmp.eq.s32.totalorder %s18, 3
      %p69 = scmp.ne.s32.totalorder %s64, %s66
      %p70 = scmp.eq.s32.totalorder %s18, 0
      %p71 = por %p69, %p70
      %p72 = scmp.ne.s32.totalorder %s64, %s66
      %p73 = scmp.eq.s32.totalorder %s23, 3
      %p74 = por %p72, %p73
      %p75 = scmp.ne.s32.totalorder %s66, %s67
      %p76 = scmp.eq.s32.totalorder %s23, 0
      %p77 = por %p75, %p76
      %p78 = scmp.ne.s32.totalorder %s66, %s67
      %p79 = scmp.eq.s32.totalorder %s24, 3
      %p80 = por %p78, %p79
      %p82 = scmp.ne.s32.totalorder %s67, %s81
      %p83 = scmp.eq.s32.totalorder %s24, 0
      %p84 = por %p82, %p83
      %s85 = ssub.s32 %s26, %s33
      %p86 = scmp.eq.s32.totalorder %s85, 0
      %s88 = sadd.s32 %s87, 1
      %s89 = scalar_select %p86, %s87, %s88
      %p92 = pneg %p86
      %p93 = scmp.eq.s32.totalorder %s18, 3
      %p94 = por %p92, %p93
      %p95 = scmp.ne.s32.totalorder %s87, %s90
      %p96 = scmp.eq.s32.totalorder %s18, 0
      %p97 = por %p95, %p96
      %p98 = scmp.ne.s32.totalorder %s87, %s90
      %p99 = scmp.eq.s32.totalorder %s23, 3
      %p100 = por %p98, %p99
      %p101 = scmp.ne.s32.totalorder %s90, %s91
      %p102 = scmp.eq.s32.totalorder %s23, 0
      %p103 = por %p101, %p102
      %p104 = scmp.ne.s32.totalorder %s90, %s91
      %p105 = scmp.eq.s32.totalorder %s24, 3
      %p106 = por %p104, %p105
      %p108 = scmp.ne.s32.totalorder %s91, %s107
      %p109 = scmp.eq.s32.totalorder %s24, 0
      %p110 = por %p108, %p109
      %s111 = ssub.s32 %s26, %s33
      %p112 = scmp.eq.s32.totalorder %s111, 0
      %s114 = sadd.s32 %s113, 1
      %s115 = scalar_select %p112, %s113, %s114
      %p118 = pneg %p112
      %p119 = scmp.eq.s32.totalorder %s18, 3
      %p120 = por %p118, %p119
      %p121 = scmp.ne.s32.totalorder %s113, %s116
      %p122 = scmp.eq.s32.totalorder %s18, 0
      %p123 = por %p121, %p122
      %p124 = scmp.ne.s32.totalorder %s113, %s116
      %p125 = scmp.eq.s32.totalorder %s23, 3
      %p126 = por %p124, %p125
      %p127 = scmp.ne.s32.totalorder %s116, %s117
      %p128 = scmp.eq.s32.totalorder %s23, 0
      %p129 = por %p127, %p128
      %p130 = scmp.ne.s32.totalorder %s116, %s117
      %p131 = scmp.eq.s32.totalorder %s24, 3
      %p132 = por %p130, %p131
      %p134 = scmp.ne.s32.totalorder %s117, %s133
      %p135 = scmp.eq.s32.totalorder %s24, 0
      %p136 = por %p134, %p135
      %s137 = ssub.s32 %s26, %s33
      %p138 = scmp.eq.s32.totalorder %s137, 0
      %s140 = sadd.s32 %s139, 1
      %s141 = scalar_select %p138, %s139, %s140
      %p144 = pneg %p138
      %p145 = scmp.eq.s32.totalorder %s18, 3
      %p146 = por %p144, %p145
      %p147 = scmp.ne.s32.totalorder %s139, %s142
      %p148 = scmp.eq.s32.totalorder %s18, 0
      %p149 = por %p147, %p148
      %p150 = scmp.ne.s32.totalorder %s139, %s142
      %p151 = scmp.eq.s32.totalorder %s23, 3
      %p152 = por %p150, %p151
      %p153 = scmp.ne.s32.totalorder %s142, %s143
      %p154 = scmp.eq.s32.totalorder %s23, 0
      %p155 = por %p153, %p154
      %p156 = scmp.ne.s32.totalorder %s142, %s143
      %p157 = scmp.eq.s32.totalorder %s24, 3
      %p158 = por %p156, %p157
      %p160 = scmp.ne.s32.totalorder %s143, %s159
      %p161 = scmp.eq.s32.totalorder %s24, 0
      %p162 = por %p160, %p161
      %s163 = ssub.s32 %s25, %s37
      %p164 = scmp.eq.s32.totalorder %s163, 0
      %s166 = sadd.s32 %s165, 1
      %s167 = scalar_select %p164, %s165, %s166
      %p170 = pneg %p164
      %p171 = scmp.eq.s32.totalorder %s18, 3
      %p172 = por %p170, %p171
      %p173 = scmp.ne.s32.totalorder %s165, %s168
      %p174 = scmp.eq.s32.totalorder %s18, 0
      %p175 = por %p173, %p174
      %p176 = scmp.ne.s32.totalorder %s165, %s168
      %p177 = scmp.eq.s32.totalorder %s23, 3
      %p178 = por %p176, %p177
      %p179 = scmp.ne.s32.totalorder %s168, %s169
      %p180 = scmp.eq.s32.totalorder %s23, 0
      %p181 = por %p179, %p180
      %p182 = scmp.ne.s32.totalorder %s168, %s169
      %p183 = scmp.eq.s32.totalorder %s24, 3
      %p184 = por %p182, %p183
      %p186 = scmp.ne.s32.totalorder %s169, %s185
      %p187 = scmp.eq.s32.totalorder %s24, 0
      %p188 = por %p186, %p187
      %p189 = scmp.le.s32.totalorder 1, %s18
      %p190 = scmp.lt.s32.totalorder %s18, 5
      %p191 = pnand %p189, %p190
      %p192 = pneg %p191
      // Predicated region
      $region9: #{tpu_custom_call.1} parent=5 // pred_check
        _
      $region10: #{tpu_custom_call.1} parent=5 // pred_check_branch
        %194 = sbr.rel (%p191) target = $region12
      $region11: #{tpu_custom_call.1} parent=5 // pred_region
        %s195 = ssub.s32 %s18, 1
        // Predicated region
        $region13: #{tpu_custom_call.1} parent=11 // pred_check
          %p196 = pneg %p77
        $region14: #{tpu_custom_call.1} parent=11 // pred_check_branch
          %198 = sbr.rel (%p196) target = $region16
        $region15: #{tpu_custom_call.1} parent=11 // pred_region
          %s200 = ssub.s32 64, 64
          %201 = vsyncadd [#allocation8], %s200
          %s203 = sshll.u32 [#allocation7], 4
          %s204 = int_to_ptr.vmem [resolvable:$true] %s203
          %206 = dma.hbm_to_vmem [thread:$0]  %s1, 64, %s204, [#allocation8]
        $region16: #{tpu_custom_call.1} parent=11 // pred_fallthru
          _
      $region12: #{tpu_custom_call.1} parent=5 // pred_fallthru
        _
      %p207 = scmp.lt.s32.totalorder %s18, 4
      // Predicated region
      $region17: #{tpu_custom_call.1} parent=5 // pred_check
        %p208 = pneg %p207
      $region18: #{tpu_custom_call.1} parent=5 // pred_check_branch
        %210 = sbr.rel (%p208) target = $region20
      $region19: #{tpu_custom_call.1} parent=5 // pred_region
        // Predicated region
        $region21: #{tpu_custom_call.1} parent=19 // pred_check
          %p211 = pneg %p50
        $region22: #{tpu_custom_call.1} parent=19 // pred_check_branch
          %213 = sbr.rel (%p211) target = $region24
        $region23: #{tpu_custom_call.1} parent=19 // pred_region
          %s214 = sand.u32 %s18, 1
          %s215 = scalar_lea.sflag [#allocation5], %s214
          %s216 = sand.u32 %s40, 1
          %s217 = smul.addr %s216, 128
          %s218 = scalar_lea.vmem [#allocation4], %s217
          %s219 = smul.u32 16, %s25
          %s221 = ssub.s32 2048, 2048
          %222 = vsyncadd %s215, %s221
          %s223 = smul.addr %s219, 128
          %s224 = scalar_lea.hbm %s0, %s223
          %s225 = sshll.u32 %s218, 4
          %s226 = int_to_ptr.vmem [resolvable:$true] %s225
          %231 = dma.hbm_to_vmem [thread:$0]  %s224, 2048, %s226, %s215, 128, 128, 8
        $region24: #{tpu_custom_call.1} parent=19 // pred_fallthru
          _
        // Predicated region
        $region25: #{tpu_custom_call.1} parent=19 // pred_check
          %p232 = pneg %p97
        $region26: #{tpu_custom_call.1} parent=19 // pred_check_branch
          %234 = sbr.rel (%p232) target = $region28
        $region27: #{tpu_custom_call.1} parent=19 // pred_region
          %p235 = scmp.lt.s32.totalorder %s26, 1
          %s236 = scalar_select %p235, %s26, 1
          %s237 = scalar_lea.vmem %s2, %s236
        $region28: #{tpu_custom_call.1} parent=19 // pred_fallthru
          _
        // Predicated region
        $region29: #{tpu_custom_call.1} parent=19 // pred_check
          %p238 = pneg %p123
        $region30: #{tpu_custom_call.1} parent=19 // pred_check_branch
          %240 = sbr.rel (%p238) target = $region32
        $region31: #{tpu_custom_call.1} parent=19 // pred_region
          %s241 = sand.u32 %s18, 1
          %s242 = scalar_lea.sflag [#allocation5], %s241
          %s243 = sand.u32 %s113, 1
          %s244 = smul.addr %s243, 64
          %s245 = scalar_lea.vmem [#allocation9], %s244
          %s247 = ssub.s32 1024, 1024
          %248 = vsyncadd %s242, %s247
          %s249 = smul.addr %s26, 64
          %s250 = scalar_lea.hbm %s3, %s249
          %s251 = sshll.u32 %s245, 4
          %s252 = int_to_ptr.vmem [resolvable:$true] %s251
          %257 = dma.hbm_to_vmem [thread:$0]  %s250, 1024, %s252, %s242, 128, 64, 4
        $region32: #{tpu_custom_call.1} parent=19 // pred_fallthru
          _
        // Predicated region
        $region33: #{tpu_custom_call.1} parent=19 // pred_check
          %p258 = pneg %p149
        $region34: #{tpu_custom_call.1} parent=19 // pred_check_branch
          %260 = sbr.rel (%p258) target = $region36
        $region35: #{tpu_custom_call.1} parent=19 // pred_region
          %s261 = sand.u32 %s18, 1
          %s262 = scalar_lea.sflag [#allocation5], %s261
          %s263 = sand.u32 %s139, 1
          %s264 = smul.addr %s263, 64
          %s265 = scalar_lea.vmem [#allocation10], %s264
          %s266 = smul.u32 16, %s26
          %s268 = ssub.s32 1024, 1024
          %269 = vsyncadd %s262, %s268
          %s270 = smul.addr %s266, 64
          %s271 = scalar_lea.hbm %s4, %s270
          %s272 = sshll.u32 %s265, 4
          %s273 = int_to_ptr.vmem [resolvable:$true] %s272
          %278 = dma.hbm_to_vmem [thread:$0]  %s271, 1024, %s273, %s262, 64, 64, 4
        $region36: #{tpu_custom_call.1} parent=19 // pred_fallthru
          _
      $region20: #{tpu_custom_call.1} parent=5 // pred_fallthru
        _
      %p279 = scmp.le.s32.totalorder 1, %s18
      %p280 = scmp.lt.s32.totalorder %s18, 5
      %p281 = pnand %p279, %p280
      %p282 = pneg %p281
      // Predicated region
      $region37: #{tpu_custom_call.1} parent=5 // pred_check
        _
      $region38: #{tpu_custom_call.1} parent=5 // pred_check_branch
        %284 = sbr.rel (%p281) target = $region40
      $region39: #{tpu_custom_call.1} parent=5 // pred_region
        %s285 = ssub.s32 %s18, 1
        %s286 = sand.u32 %s23, 1
        %s287 = scalar_lea.sflag [#allocation5], %s286
        %s288 = sand.u32 %s43, 1
        %s289 = smul.addr %s288, 128
        %s290 = scalar_lea.vmem [#allocation4], %s289
        // Predicated region
        $region41: #{tpu_custom_call.1} parent=39 // pred_check
          %p291 = pneg %p56
        $region42: #{tpu_custom_call.1} parent=39 // pred_check_branch
          %293 = sbr.rel (%p291) target = $region44
        $region43: #{tpu_custom_call.1} parent=39 // pred_region
          %294 = dma.done %s287, 2048
        $region44: #{tpu_custom_call.1} parent=39 // pred_fallthru
          _
        // Predicated region
        $region45: #{tpu_custom_call.1} parent=39 // pred_check
          %p295 = pneg %p77
        $region46: #{tpu_custom_call.1} parent=39 // pred_check_branch
          %297 = sbr.rel (%p295) target = $region48
        $region47: #{tpu_custom_call.1} parent=39 // pred_region
          %298 = dma.done [#allocation8], 64
        $region48: #{tpu_custom_call.1} parent=39 // pred_fallthru
          _
        %s299 = sand.u32 %s23, 1
        %s300 = scalar_lea.sflag [#allocation5], %s299
        %s301 = sand.u32 %s116, 1
        %s302 = smul.addr %s301, 64
        %s303 = scalar_lea.vmem [#allocation9], %s302
        // Predicated region
        $region49: #{tpu_custom_call.1} parent=39 // pred_check
          %p304 = pneg %p129
        $region50: #{tpu_custom_call.1} parent=39 // pred_check_branch
          %306 = sbr.rel (%p304) target = $region52
        $region51: #{tpu_custom_call.1} parent=39 // pred_region
          %307 = dma.done %s300, 1024
        $region52: #{tpu_custom_call.1} parent=39 // pred_fallthru
          _
        %s308 = sand.u32 %s23, 1
        %s309 = scalar_lea.sflag [#allocation5], %s308
        %s310 = sand.u32 %s142, 1
        %s311 = smul.addr %s310, 64
        %s312 = scalar_lea.vmem [#allocation10], %s311
        // Predicated region
        $region53: #{tpu_custom_call.1} parent=39 // pred_check
          %p313 = pneg %p155
        $region54: #{tpu_custom_call.1} parent=39 // pred_check_branch
          %315 = sbr.rel (%p313) target = $region56
        $region55: #{tpu_custom_call.1} parent=39 // pred_region
          %316 = dma.done %s309, 1024
        $region56: #{tpu_custom_call.1} parent=39 // pred_fallthru
          _
        %s317 = sand.u32 %s23, 1
        %s318 = scalar_lea.sflag [#allocation5], %s317
        %s319 = sand.u32 %s43, 1
        %s320 = smul.addr %s319, 128
        %s321 = scalar_lea.vmem [#allocation4], %s320
        %p322 = pneg %p56
        %p323 = pneg %p53
        %p324 = pneg %p77
        %p325 = pneg %p74
        %p326 = scmp.lt.s32.totalorder %s28, 1
        %s327 = scalar_select %p326, %s28, 1
        %s328 = scalar_lea.vmem %s2, %s327
        %p329 = pneg %p103
        %p330 = pneg %p100
        %s331 = sand.u32 %s23, 1
        %s332 = scalar_lea.sflag [#allocation5], %s331
        %s333 = sand.u32 %s116, 1
        %s334 = smul.addr %s333, 64
        %s335 = scalar_lea.vmem [#allocation9], %s334
        %p336 = pneg %p129
        %p337 = pneg %p126
        %s338 = sand.u32 %s23, 1
        %s339 = scalar_lea.sflag [#allocation5], %s338
        %s340 = sand.u32 %s142, 1
        %s341 = smul.addr %s340, 64
        %s342 = scalar_lea.vmem [#allocation10], %s341
        %p343 = pneg %p155
        %p344 = pneg %p152
        %p345 = pneg %p181
        %p346 = pneg %p178
        %s347 = sand.u32 %s168, 1
        %s348 = scalar_lea.sflag [#allocation6], %s347
        %s349 = sand.u32 %s168, 1
        %s350 = smul.addr %s349, 128
        %s351 = scalar_lea.vmem [#allocation11], %s350
        %s352 = smul.u32 16, %s27
        %p353 = scmp.lt.s32.totalorder %s28, 1
        %s354 = scalar_select %p353, %s28, 1
        %s355 = scalar_lea.vmem %s2, %s354
        %s356 = smul.u32 16, %s28
        %s357 = smul.u32 16, %s27
        %p359 = scmp.eq.s32.totalorder %s28, 0
        // Predicated region
        $region57: #{tpu_custom_call.1} parent=39 // pred_check
          %p360 = pneg %p359
        $region58: #{tpu_custom_call.1} parent=39 // pred_check_branch
          %362 = sbr.rel (%p360) target = $region60
        $region59: #{tpu_custom_call.1} parent=39 // pred_region
          %v363 = vld [vmem:[%s290] sm:$0xff]
          %v364 = vld [vmem:[%s290 + $0x8] sm:$0xff]
          %v365 = vld [vmem:[%s290 + $0x10] sm:$0xff]
          %v366 = vld [vmem:[%s290 + $0x18] sm:$0xff]
          %v367 = vld [vmem:[%s290 + $0x20] sm:$0xff]
          %v368 = vld [vmem:[%s290 + $0x28] sm:$0xff]
          %v369 = vld [vmem:[%s290 + $0x30] sm:$0xff]
          %v370 = vld [vmem:[%s290 + $0x38] sm:$0xff]
          %v371 = vld [vmem:[%s290 + $0x40] sm:$0xff]
          %v372 = vld [vmem:[%s290 + $0x48] sm:$0xff]
          %v373 = vld [vmem:[%s290 + $0x50] sm:$0xff]
          %v374 = vld [vmem:[%s290 + $0x58] sm:$0xff]
          %v375 = vld [vmem:[%s290 + $0x60] sm:$0xff]
          %v376 = vld [vmem:[%s290 + $0x68] sm:$0xff]
          %v377 = vld [vmem:[%s290 + $0x70] sm:$0xff]
          %v378 = vld [vmem:[%s290 + $0x78] sm:$0xff]
          %v379 = vld [vmem:[#allocation7] sm:$0x1]
          %v380 = vld [vmem:[#allocation7 + $0x1] sm:$0x1]
          %381 = vadd.xlane.f32.xlu0 %v363
          %v382 = vpop.xlane.xlu0 %381
          %383 = vadd.xlane.f32.xlu0 %v364
          %v384 = vpop.xlane.xlu0 %383
          %385 = vadd.xlane.f32.xlu0 %v365
          %v386 = vpop.xlane.xlu0 %385
          %387 = vadd.xlane.f32.xlu0 %v366
          %v388 = vpop.xlane.xlu0 %387
          %389 = vadd.xlane.f32.xlu0 %v367
          %v390 = vpop.xlane.xlu0 %389
          %391 = vadd.xlane.f32.xlu0 %v368
          %v392 = vpop.xlane.xlu0 %391
          %393 = vadd.xlane.f32.xlu0 %v369
          %v394 = vpop.xlane.xlu0 %393
          %395 = vadd.xlane.f32.xlu0 %v370
          %v396 = vpop.xlane.xlu0 %395
          %397 = vadd.xlane.f32.xlu0 %v371
          %v398 = vpop.xlane.xlu0 %397
          %399 = vadd.xlane.f32.xlu0 %v372
          %v400 = vpop.xlane.xlu0 %399
          %401 = vadd.xlane.f32.xlu0 %v373
          %v402 = vpop.xlane.xlu0 %401
          %403 = vadd.xlane.f32.xlu0 %v374
          %v404 = vpop.xlane.xlu0 %403
          %405 = vadd.xlane.f32.xlu0 %v375
          %v406 = vpop.xlane.xlu0 %405
          %407 = vadd.xlane.f32.xlu0 %v376
          %v408 = vpop.xlane.xlu0 %407
          %409 = vadd.xlane.f32.xlu0 %v377
          %v410 = vpop.xlane.xlu0 %409
          %411 = vadd.xlane.f32.xlu0 %v378
          %v412 = vpop.xlane.xlu0 %411
          %v413 = vmul.f32 %v382, 0.0078125
          %v414 = vmul.f32 %v384, 0.0078125
          %v415 = vmul.f32 %v386, 0.0078125
          %v416 = vmul.f32 %v388, 0.0078125
          %v417 = vmul.f32 %v390, 0.0078125
          %v418 = vmul.f32 %v392, 0.0078125
          %v419 = vmul.f32 %v394, 0.0078125
          %v420 = vmul.f32 %v396, 0.0078125
          %v421 = vmul.f32 %v398, 0.0078125
          %v422 = vmul.f32 %v400, 0.0078125
          %v423 = vmul.f32 %v402, 0.0078125
          %v424 = vmul.f32 %v404, 0.0078125
          %v425 = vmul.f32 %v406, 0.0078125
          %v426 = vmul.f32 %v408, 0.0078125
          %v427 = vmul.f32 %v410, 0.0078125
          %v428 = vmul.f32 %v412, 0.0078125
          %v429 = vmul.f32 %v363, %v363
          %v430 = vmul.f32 %v364, %v364
          %v431 = vmul.f32 %v365, %v365
          %v432 = vmul.f32 %v366, %v366
          %v433 = vmul.f32 %v367, %v367
          %v434 = vmul.f32 %v368, %v368
          %v435 = vmul.f32 %v369, %v369
          %v436 = vmul.f32 %v370, %v370
          %v437 = vmul.f32 %v371, %v371
          %v438 = vmul.f32 %v372, %v372
          %v439 = vmul.f32 %v373, %v373
          %v440 = vmul.f32 %v374, %v374
          %v441 = vmul.f32 %v375, %v375
          %v442 = vmul.f32 %v376, %v376
          %v443 = vmul.f32 %v377, %v377
          %v444 = vmul.f32 %v378, %v378
          %445 = vadd.xlane.f32.xlu0 %v429
          %v446 = vpop.xlane.xlu0 %445
          %447 = vadd.xlane.f32.xlu0 %v430
          %v448 = vpop.xlane.xlu0 %447
          %449 = vadd.xlane.f32.xlu0 %v431
          %v450 = vpop.xlane.xlu0 %449
          %451 = vadd.xlane.f32.xlu0 %v432
          %v452 = vpop.xlane.xlu0 %451
          %453 = vadd.xlane.f32.xlu0 %v433
          %v454 = vpop.xlane.xlu0 %453
          %455 = vadd.xlane.f32.xlu0 %v434
          %v456 = vpop.xlane.xlu0 %455
          %457 = vadd.xlane.f32.xlu0 %v435
          %v458 = vpop.xlane.xlu0 %457
          %459 = vadd.xlane.f32.xlu0 %v436
          %v460 = vpop.xlane.xlu0 %459
          %461 = vadd.xlane.f32.xlu0 %v437
          %v462 = vpop.xlane.xlu0 %461
          %463 = vadd.xlane.f32.xlu0 %v438
          %v464 = vpop.xlane.xlu0 %463
          %465 = vadd.xlane.f32.xlu0 %v439
          %v466 = vpop.xlane.xlu0 %465
          %467 = vadd.xlane.f32.xlu0 %v440
          %v468 = vpop.xlane.xlu0 %467
          %469 = vadd.xlane.f32.xlu0 %v441
          %v470 = vpop.xlane.xlu0 %469
          %471 = vadd.xlane.f32.xlu0 %v442
          %v472 = vpop.xlane.xlu0 %471
          %473 = vadd.xlane.f32.xlu0 %v443
          %v474 = vpop.xlane.xlu0 %473
          %475 = vadd.xlane.f32.xlu0 %v444
          %v476 = vpop.xlane.xlu0 %475
          %v477 = vmul.f32 %v446, 0.0078125
          %v478 = vmul.f32 %v448, 0.0078125
          %v479 = vmul.f32 %v450, 0.0078125
          %v480 = vmul.f32 %v452, 0.0078125
          %v481 = vmul.f32 %v454, 0.0078125
          %v482 = vmul.f32 %v456, 0.0078125
          %v483 = vmul.f32 %v458, 0.0078125
          %v484 = vmul.f32 %v460, 0.0078125
          %v485 = vmul.f32 %v462, 0.0078125
          %v486 = vmul.f32 %v464, 0.0078125
          %v487 = vmul.f32 %v466, 0.0078125
          %v488 = vmul.f32 %v468, 0.0078125
          %v489 = vmul.f32 %v470, 0.0078125
          %v490 = vmul.f32 %v472, 0.0078125
          %v491 = vmul.f32 %v474, 0.0078125
          %v492 = vmul.f32 %v476, 0.0078125
          %v493 = vmul.f32 %v413, %v413
          %v494 = vmul.f32 %v414, %v414
          %v495 = vmul.f32 %v415, %v415
          %v496 = vmul.f32 %v416, %v416
          %v497 = vmul.f32 %v417, %v417
          %v498 = vmul.f32 %v418, %v418
          %v499 = vmul.f32 %v419, %v419
          %v500 = vmul.f32 %v420, %v420
          %v501 = vmul.f32 %v421, %v421
          %v502 = vmul.f32 %v422, %v422
          %v503 = vmul.f32 %v423, %v423
          %v504 = vmul.f32 %v424, %v424
          %v505 = vmul.f32 %v425, %v425
          %v506 = vmul.f32 %v426, %v426
          %v507 = vmul.f32 %v427, %v427
          %v508 = vmul.f32 %v428, %v428
          %v509 = vsub.f32 %v477, %v493
          %v510 = vsub.f32 %v478, %v494
          %v511 = vsub.f32 %v479, %v495
          %v512 = vsub.f32 %v480, %v496
          %v513 = vsub.f32 %v481, %v497
          %v514 = vsub.f32 %v482, %v498
          %v515 = vsub.f32 %v483, %v499
          %v516 = vsub.f32 %v484, %v500
          %v517 = vsub.f32 %v485, %v501
          %v518 = vsub.f32 %v486, %v502
          %v519 = vsub.f32 %v487, %v503
          %v520 = vsub.f32 %v488, %v504
          %v521 = vsub.f32 %v489, %v505
          %v522 = vsub.f32 %v490, %v506
          %v523 = vsub.f32 %v491, %v507
          %v524 = vsub.f32 %v492, %v508
          %v525 = vsub.f32 %v363, %v413
          %v526 = vsub.f32 %v364, %v414
          %v527 = vsub.f32 %v365, %v415
          %v528 = vsub.f32 %v366, %v416
          %v529 = vsub.f32 %v367, %v417
          %v530 = vsub.f32 %v368, %v418
          %v531 = vsub.f32 %v369, %v419
          %v532 = vsub.f32 %v370, %v420
          %v533 = vsub.f32 %v371, %v421
          %v534 = vsub.f32 %v372, %v422
          %v535 = vsub.f32 %v373, %v423
          %v536 = vsub.f32 %v374, %v424
          %v537 = vsub.f32 %v375, %v425
          %v538 = vsub.f32 %v376, %v426
          %v539 = vsub.f32 %v377, %v427
          %v540 = vsub.f32 %v378, %v428
          %v541 = vadd.f32 %v509, 1e-05
          %v542 = vadd.f32 %v510, 1e-05
          %v543 = vadd.f32 %v511, 1e-05
          %v544 = vadd.f32 %v512, 1e-05
          %v545 = vadd.f32 %v513, 1e-05
          %v546 = vadd.f32 %v514, 1e-05
          %v547 = vadd.f32 %v515, 1e-05
          %v548 = vadd.f32 %v516, 1e-05
          %v549 = vadd.f32 %v517, 1e-05
          %v550 = vadd.f32 %v518, 1e-05
          %v551 = vadd.f32 %v519, 1e-05
          %v552 = vadd.f32 %v520, 1e-05
          %v553 = vadd.f32 %v521, 1e-05
          %v554 = vadd.f32 %v522, 1e-05
          %v555 = vadd.f32 %v523, 1e-05
          %v556 = vadd.f32 %v524, 1e-05
          %v557 = vrsqrt.pop %v541
          %v558 = vrsqrt.pop %v542
          %v559 = vrsqrt.pop %v543
          %v560 = vrsqrt.pop %v544
          %v561 = vrsqrt.pop %v545
          %v562 = vrsqrt.pop %v546
          %v563 = vrsqrt.pop %v547
          %v564 = vrsqrt.pop %v548
          %v565 = vrsqrt.pop %v549
          %v566 = vrsqrt.pop %v550
          %v567 = vrsqrt.pop %v551
          %v568 = vrsqrt.pop %v552
          %v569 = vrsqrt.pop %v553
          %v570 = vrsqrt.pop %v554
          %v571 = vrsqrt.pop %v555
          %v572 = vrsqrt.pop %v556
          %v573 = vmul.f32 %v525, %v557
          %v574 = vmul.f32 %v526, %v558
          %v575 = vmul.f32 %v527, %v559
          %v576 = vmul.f32 %v528, %v560
          %v577 = vmul.f32 %v529, %v561
          %v578 = vmul.f32 %v530, %v562
          %v579 = vmul.f32 %v531, %v563
          %v580 = vmul.f32 %v532, %v564
          %v581 = vmul.f32 %v533, %v565
          %v582 = vmul.f32 %v534, %v566
          %v583 = vmul.f32 %v535, %v567
          %v584 = vmul.f32 %v536, %v568
          %v585 = vmul.f32 %v537, %v569
          %v586 = vmul.f32 %v538, %v570
          %v587 = vmul.f32 %v539, %v571
          %v588 = vmul.f32 %v540, %v572
          %v589 = vlaneseq
          %v590 = vshrl.u32 %v589, 7
          %v591 = vsub.s32 0, %v590
          %v592 = vrot.slane %v379, %v591
          %v593 = vmul.f32 %v573, %v592
          %v594 = vmul.f32 %v574, %v592
          %v595 = vmul.f32 %v575, %v592
          %v596 = vmul.f32 %v576, %v592
          %v597 = vmul.f32 %v577, %v592
          %v598 = vmul.f32 %v578, %v592
          %v599 = vmul.f32 %v579, %v592
          %v600 = vmul.f32 %v580, %v592
          %v601 = vmul.f32 %v581, %v592
          %v602 = vmul.f32 %v582, %v592
          %v603 = vmul.f32 %v583, %v592
          %v604 = vmul.f32 %v584, %v592
          %v605 = vmul.f32 %v585, %v592
          %v606 = vmul.f32 %v586, %v592
          %v607 = vmul.f32 %v587, %v592
          %v608 = vmul.f32 %v588, %v592
          %v609 = vlaneseq
          %v610 = vshrl.u32 %v609, 7
          %v611 = vsub.s32 0, %v610
          %v612 = vrot.slane %v380, %v611
          %v613 = vadd.f32 %v593, %v612
          %v614 = vadd.f32 %v594, %v612
          %v615 = vadd.f32 %v595, %v612
          %v616 = vadd.f32 %v596, %v612
          %v617 = vadd.f32 %v597, %v612
          %v618 = vadd.f32 %v598, %v612
          %v619 = vadd.f32 %v599, %v612
          %v620 = vadd.f32 %v600, %v612
          %v621 = vadd.f32 %v601, %v612
          %v622 = vadd.f32 %v602, %v612
          %v623 = vadd.f32 %v603, %v612
          %v624 = vadd.f32 %v604, %v612
          %v625 = vadd.f32 %v605, %v612
          %v626 = vadd.f32 %v606, %v612
          %v627 = vadd.f32 %v607, %v612
          %v628 = vadd.f32 %v608, %v612
          %v629 = vpack.c.bf16 %v614, %v613
          %v630 = vpack.c.bf16 %v616, %v615
          %v631 = vpack.c.bf16 %v618, %v617
          %v632 = vpack.c.bf16 %v620, %v619
          %v633 = vpack.c.bf16 %v622, %v621
          %v634 = vpack.c.bf16 %v624, %v623
          %v635 = vpack.c.bf16 %v626, %v625
          %v636 = vpack.c.bf16 %v628, %v627
          %637 = vst [vmem:[#allocation2] sm:$0xff] %v629
          %638 = vst [vmem:[#allocation2 + $0x8] sm:$0xff] %v630
          %639 = vst [vmem:[#allocation2 + $0x10] sm:$0xff] %v631
          %640 = vst [vmem:[#allocation2 + $0x18] sm:$0xff] %v632
          %641 = vst [vmem:[#allocation2 + $0x20] sm:$0xff] %v633
          %642 = vst [vmem:[#allocation2 + $0x28] sm:$0xff] %v634
          %643 = vst [vmem:[#allocation2 + $0x30] sm:$0xff] %v635
          %644 = vst [vmem:[#allocation2 + $0x38] sm:$0xff] %v636
          %645 = vst [vmem:[#allocation3] sm:$0xff] 0.0
          %646 = vst [vmem:[#allocation3 + $0x8] sm:$0xff] 0.0
          %647 = vst [vmem:[#allocation3 + $0x10] sm:$0xff] 0.0
          %648 = vst [vmem:[#allocation3 + $0x18] sm:$0xff] 0.0
          %649 = vst [vmem:[#allocation3 + $0x20] sm:$0xff] 0.0
          %650 = vst [vmem:[#allocation3 + $0x28] sm:$0xff] 0.0
          %651 = vst [vmem:[#allocation3 + $0x30] sm:$0xff] 0.0
          %652 = vst [vmem:[#allocation3 + $0x38] sm:$0xff] 0.0
          %653 = vst [vmem:[#allocation3 + $0x40] sm:$0xff] 0.0
          %654 = vst [vmem:[#allocation3 + $0x48] sm:$0xff] 0.0
          %655 = vst [vmem:[#allocation3 + $0x50] sm:$0xff] 0.0
          %656 = vst [vmem:[#allocation3 + $0x58] sm:$0xff] 0.0
          %657 = vst [vmem:[#allocation3 + $0x60] sm:$0xff] 0.0
          %658 = vst [vmem:[#allocation3 + $0x68] sm:$0xff] 0.0
          %659 = vst [vmem:[#allocation3 + $0x70] sm:$0xff] 0.0
          %660 = vst [vmem:[#allocation3 + $0x78] sm:$0xff] 0.0
        $region60: #{tpu_custom_call.1} parent=39 // pred_fallthru
          _
        %v661 = vld [vmem:[#allocation2] sm:$0xff]
        %v662 = vld [vmem:[#allocation2 + $0x8] sm:$0xff]
        %v663 = vld [vmem:[#allocation2 + $0x10] sm:$0xff]
        %v664 = vld [vmem:[#allocation2 + $0x18] sm:$0xff]
        %v665 = vld [vmem:[#allocation2 + $0x20] sm:$0xff]
        %v666 = vld [vmem:[#allocation2 + $0x28] sm:$0xff]
        %v667 = vld [vmem:[#allocation2 + $0x30] sm:$0xff]
        %v668 = vld [vmem:[#allocation2 + $0x38] sm:$0xff]
        %v669 = vld [vmem:[%s303] sm:$0xf]
        %v670 = vld [vmem:[%s303 + $0x4] sm:$0xf]
        %v671 = vld [vmem:[%s303 + $0x8] sm:$0xf]
        %v672 = vld [vmem:[%s303 + $0xc] sm:$0xf]
        %v673 = vld [vmem:[%s303 + $0x10] sm:$0xf]
        %v674 = vld [vmem:[%s303 + $0x14] sm:$0xf]
        %v675 = vld [vmem:[%s303 + $0x18] sm:$0xf]
        %v676 = vld [vmem:[%s303 + $0x1c] sm:$0xf]
        %v677 = vld [vmem:[%s303 + $0x20] sm:$0xf]
        %v678 = vld [vmem:[%s303 + $0x24] sm:$0xf]
        %v679 = vld [vmem:[%s303 + $0x28] sm:$0xf]
        %v680 = vld [vmem:[%s303 + $0x2c] sm:$0xf]
        %v681 = vld [vmem:[%s303 + $0x30] sm:$0xf]
        %v682 = vld [vmem:[%s303 + $0x34] sm:$0xf]
        %v683 = vld [vmem:[%s303 + $0x38] sm:$0xf]
        %v684 = vld [vmem:[%s303 + $0x3c] sm:$0xf]
        %v685 = vld [vmem:[%s355] sm:$0x1]
        %v687 = vlaneseq
        %v688 = vshrl.u32 %v687, 7
        %v689 = vsub.s32 0, %v688
        %v690 = vrot.slane %v685, %v689
        %v708 = vunpack.c.l.b16 %v669
        %v709 = vunpack.c.l.b16 %v670
        %v710 = vunpack.c.l.b16 %v671
        %v711 = vunpack.c.l.b16 %v672
        %v712 = vunpack.c.l.b16 %v673
        %v713 = vunpack.c.l.b16 %v674
        %v714 = vunpack.c.l.b16 %v675
        %v715 = vunpack.c.l.b16 %v676
        %v716 = vunpack.c.l.b16 %v677
        %v717 = vunpack.c.l.b16 %v678
        %v718 = vunpack.c.l.b16 %v679
        %v719 = vunpack.c.l.b16 %v680
        %v720 = vunpack.c.l.b16 %v681
        %v721 = vunpack.c.l.b16 %v682
        %v722 = vunpack.c.l.b16 %v683
        %v723 = vunpack.c.l.b16 %v684
        %v724 = vpack.c.b16 %v709, %v708
        %v725 = vpack.c.b16 %v711, %v710
        %v726 = vpack.c.b16 %v713, %v712
        %v727 = vpack.c.b16 %v715, %v714
        %v728 = vpack.c.b16 %v717, %v716
        %v729 = vpack.c.b16 %v719, %v718
        %v730 = vpack.c.b16 %v721, %v720
        %v731 = vpack.c.b16 %v723, %v722
        %740 = vmatprep.subr.bf16.mxu0 0
        %741 = vmatpush1.bf16.msra.mxu0 %v724
        %742 = vmatprep.subr.bf16.mxu0 0
        %743 = vmatpush1.bf16.msra.mxu0 %v725
        %744 = vmatprep.subr.bf16.mxu0 0
        %745 = vmatpush1.bf16.msra.mxu0 %v726
        %746 = vmatprep.subr.bf16.mxu0 0
        %747 = vmatpush1.bf16.msra.mxu0 %v727
        %748 = vmatprep.subr.bf16.mxu0 0
        %749 = vmatpush1.bf16.msra.mxu0 %v728
        %750 = vmatprep.subr.bf16.mxu0 0
        %751 = vmatpush1.bf16.msra.mxu0 %v729
        %752 = vmatprep.subr.bf16.mxu0 0
        %753 = vmatpush1.bf16.msra.mxu0 %v730
        %754 = vmatprep.subr.bf16.mxu0 0
        %755 = vmatpush1.bf16.msra.mxu0 %v731
        %756 = vmatprep.subr.bf16.mxu0 0
        %757 = vmatpush1.bf16.msra.mxu0 0
        %758 = vmatprep.subr.bf16.mxu0 0
        %759 = vmatpush1.bf16.msra.mxu0 0
        %760 = vmatprep.subr.bf16.mxu0 0
        %761 = vmatpush1.bf16.msra.mxu0 0
        %762 = vmatprep.subr.bf16.mxu0 0
        %763 = vmatpush1.bf16.msra.mxu0 0
        %764 = vmatprep.subr.bf16.mxu0 0
        %765 = vmatpush1.bf16.msra.mxu0 0
        %766 = vmatprep.subr.bf16.mxu0 0
        %767 = vmatpush1.bf16.msra.mxu0 0
        %768 = vmatprep.subr.bf16.mxu0 0
        %769 = vmatpush1.bf16.msra.mxu0 0
        %770 = vmatprep.subr.bf16.mxu0 0
        %771 = vmatpush1.bf16.msra.mxu0 0
        %772 = vmatprep.mubr.bf16.mxu0 0
        %773 = vmatmul.mubr.bf16.gmra.mrb[0].mxu0 %v661
        %v774 = vpop.f32.mrb[0].mxu0
        %v775 = vadd.f32 %v690, %v774
        %v776 = vpop.f32.mrb[0].mxu0
        %v777 = vpop.f32.mrb[0].mxu0
        %v778 = vadd.f32 %v690, %v777
        %v779 = vpop.f32.mrb[0].mxu0
        %780 = vmatprep.mubr.bf16.mxu0 0
        %781 = vmatmul.mubr.bf16.gmra.mrb[0].mxu0 %v662
        %v782 = vpop.f32.mrb[0].mxu0
        %v783 = vadd.f32 %v690, %v782
        %v784 = vpop.f32.mrb[0].mxu0
        %v785 = vpop.f32.mrb[0].mxu0
        %v786 = vadd.f32 %v690, %v785
        %v787 = vpop.f32.mrb[0].mxu0
        %788 = vmatprep.mubr.bf16.mxu0 0
        %789 = vmatmul.mubr.bf16.gmra.mrb[0].mxu0 %v663
        %v790 = vpop.f32.mrb[0].mxu0
        %v791 = vadd.f32 %v690, %v790
        %v792 = vpop.f32.mrb[0].mxu0
        %v793 = vpop.f32.mrb[0].mxu0
        %v794 = vadd.f32 %v690, %v793
        %v795 = vpop.f32.mrb[0].mxu0
        %796 = vmatprep.mubr.bf16.mxu0 0
        %797 = vmatmul.mubr.bf16.gmra.mrb[0].mxu0 %v664
        %v798 = vpop.f32.mrb[0].mxu0
        %v799 = vadd.f32 %v690, %v798
        %v800 = vpop.f32.mrb[0].mxu0
        %v801 = vpop.f32.mrb[0].mxu0
        %v802 = vadd.f32 %v690, %v801
        %v803 = vpop.f32.mrb[0].mxu0
        %804 = vmatprep.mubr.bf16.mxu0 0
        %805 = vmatmul.mubr.bf16.gmra.mrb[0].mxu0 %v665
        %v806 = vpop.f32.mrb[0].mxu0
        %v807 = vadd.f32 %v690, %v806
        %v808 = vpop.f32.mrb[0].mxu0
        %v809 = vpop.f32.mrb[0].mxu0
        %v810 = vadd.f32 %v690, %v809
        %v811 = vpop.f32.mrb[0].mxu0
        %812 = vmatprep.mubr.bf16.mxu0 0
        %813 = vmatmul.mubr.bf16.gmra.mrb[0].mxu0 %v666
        %v814 = vpop.f32.mrb[0].mxu0
        %v815 = vadd.f32 %v690, %v814
        %v816 = vpop.f32.mrb[0].mxu0
        %v817 = vpop.f32.mrb[0].mxu0
        %v818 = vadd.f32 %v690, %v817
        %v819 = vpop.f32.mrb[0].mxu0
        %820 = vmatprep.mubr.bf16.mxu0 0
        %821 = vmatmul.mubr.bf16.gmra.mrb[0].mxu0 %v667
        %v822 = vpop.f32.mrb[0].mxu0
        %v823 = vadd.f32 %v690, %v822
        %v824 = vpop.f32.mrb[0].mxu0
        %v825 = vpop.f32.mrb[0].mxu0
        %v826 = vadd.f32 %v690, %v825
        %v827 = vpop.f32.mrb[0].mxu0
        %828 = vmatprep.mubr.bf16.mxu0 0
        %829 = vmatmul.mubr.bf16.gmra.mrb[0].mxu0 %v668
        %v830 = vpop.f32.mrb[0].mxu0
        %v831 = vadd.f32 %v690, %v830
        %v832 = vpop.f32.mrb[0].mxu0
        %v833 = vpop.f32.mrb[0].mxu0
        %v834 = vadd.f32 %v690, %v833
        %v835 = vpop.f32.mrb[0].mxu0
        %836 = vdwg.mxu0
        %v837 = vmul.f32 %v775, %v775
        %v838 = vmul.f32 %v778, %v778
        %v839 = vmul.f32 %v783, %v783
        %v840 = vmul.f32 %v786, %v786
        %v841 = vmul.f32 %v791, %v791
        %v842 = vmul.f32 %v794, %v794
        %v843 = vmul.f32 %v799, %v799
        %v844 = vmul.f32 %v802, %v802
        %v845 = vmul.f32 %v807, %v807
        %v846 = vmul.f32 %v810, %v810
        %v847 = vmul.f32 %v815, %v815
        %v848 = vmul.f32 %v818, %v818
        %v849 = vmul.f32 %v823, %v823
        %v850 = vmul.f32 %v826, %v826
        %v851 = vmul.f32 %v831, %v831
        %v852 = vmul.f32 %v834, %v834
        %v853 = vmul.f32 %v775, %v837
        %v854 = vmul.f32 %v778, %v838
        %v855 = vmul.f32 %v783, %v839
        %v856 = vmul.f32 %v786, %v840
        %v857 = vmul.f32 %v791, %v841
        %v858 = vmul.f32 %v794, %v842
        %v859 = vmul.f32 %v799, %v843
        %v860 = vmul.f32 %v802, %v844
        %v861 = vmul.f32 %v807, %v845
        %v862 = vmul.f32 %v810, %v846
        %v863 = vmul.f32 %v815, %v847
        %v864 = vmul.f32 %v818, %v848
        %v865 = vmul.f32 %v823, %v849
        %v866 = vmul.f32 %v826, %v850
        %v867 = vmul.f32 %v831, %v851
        %v868 = vmul.f32 %v834, %v852
        %v869 = vmul.f32 %v853, 0.044715
        %v870 = vmul.f32 %v854, 0.044715
        %v871 = vmul.f32 %v855, 0.044715
        %v872 = vmul.f32 %v856, 0.044715
        %v873 = vmul.f32 %v857, 0.044715
        %v874 = vmul.f32 %v858, 0.044715
        %v875 = vmul.f32 %v859, 0.044715
        %v876 = vmul.f32 %v860, 0.044715
        %v877 = vmul.f32 %v861, 0.044715
        %v878 = vmul.f32 %v862, 0.044715
        %v879 = vmul.f32 %v863, 0.044715
        %v880 = vmul.f32 %v864, 0.044715
        %v881 = vmul.f32 %v865, 0.044715
        %v882 = vmul.f32 %v866, 0.044715
        %v883 = vmul.f32 %v867, 0.044715
        %v884 = vmul.f32 %v868, 0.044715
        %v885 = vadd.f32 %v775, %v869
        %v886 = vadd.f32 %v778, %v870
        %v887 = vadd.f32 %v783, %v871
        %v888 = vadd.f32 %v786, %v872
        %v889 = vadd.f32 %v791, %v873
        %v890 = vadd.f32 %v794, %v874
        %v891 = vadd.f32 %v799, %v875
        %v892 = vadd.f32 %v802, %v876
        %v893 = vadd.f32 %v807, %v877
        %v894 = vadd.f32 %v810, %v878
        %v895 = vadd.f32 %v815, %v879
        %v896 = vadd.f32 %v818, %v880
        %v897 = vadd.f32 %v823, %v881
        %v898 = vadd.f32 %v826, %v882
        %v899 = vadd.f32 %v831, %v883
        %v900 = vadd.f32 %v834, %v884
        %v901 = vmul.f32 %v885, 0.7978846
        %v902 = vmul.f32 %v886, 0.7978846
        %v903 = vmul.f32 %v887, 0.7978846
        %v904 = vmul.f32 %v888, 0.7978846
        %v905 = vmul.f32 %v889, 0.7978846
        %v906 = vmul.f32 %v890, 0.7978846
        %v907 = vmul.f32 %v891, 0.7978846
        %v908 = vmul.f32 %v892, 0.7978846
        %v909 = vmul.f32 %v893, 0.7978846
        %v910 = vmul.f32 %v894, 0.7978846
        %v911 = vmul.f32 %v895, 0.7978846
        %v912 = vmul.f32 %v896, 0.7978846
        %v913 = vmul.f32 %v897, 0.7978846
        %v914 = vmul.f32 %v898, 0.7978846
        %v915 = vmul.f32 %v899, 0.7978846
        %v916 = vmul.f32 %v900, 0.7978846
        %v917 = vtanh.pop %v901
        %v918 = vtanh.pop %v902
        %v919 = vtanh.pop %v903
        %v920 = vtanh.pop %v904
        %v921 = vtanh.pop %v905
        %v922 = vtanh.pop %v906
        %v923 = vtanh.pop %v907
        %v924 = vtanh.pop %v908
        %v925 = vtanh.pop %v909
        %v926 = vtanh.pop %v910
        %v927 = vtanh.pop %v911
        %v928 = vtanh.pop %v912
        %v929 = vtanh.pop %v913
        %v930 = vtanh.pop %v914
        %v931 = vtanh.pop %v915
        %v932 = vtanh.pop %v916
        %v933 = vadd.f32 %v917, 1.0
        %v934 = vadd.f32 %v918, 1.0
        %v935 = vadd.f32 %v919, 1.0
        %v936 = vadd.f32 %v920, 1.0
        %v937 = vadd.f32 %v921, 1.0
        %v938 = vadd.f32 %v922, 1.0
        %v939 = vadd.f32 %v923, 1.0
        %v940 = vadd.f32 %v924, 1.0
        %v941 = vadd.f32 %v925, 1.0
        %v942 = vadd.f32 %v926, 1.0
        %v943 = vadd.f32 %v927, 1.0
        %v944 = vadd.f32 %v928, 1.0
        %v945 = vadd.f32 %v929, 1.0
        %v946 = vadd.f32 %v930, 1.0
        %v947 = vadd.f32 %v931, 1.0
        %v948 = vadd.f32 %v932, 1.0
        %v949 = vmul.f32 %v933, 0.5
        %v950 = vmul.f32 %v934, 0.5
        %v951 = vmul.f32 %v935, 0.5
        %v952 = vmul.f32 %v936, 0.5
        %v953 = vmul.f32 %v937, 0.5
        %v954 = vmul.f32 %v938, 0.5
        %v955 = vmul.f32 %v939, 0.5
        %v956 = vmul.f32 %v940, 0.5
        %v957 = vmul.f32 %v941, 0.5
        %v958 = vmul.f32 %v942, 0.5
        %v959 = vmul.f32 %v943, 0.5
        %v960 = vmul.f32 %v944, 0.5
        %v961 = vmul.f32 %v945, 0.5
        %v962 = vmul.f32 %v946, 0.5
        %v963 = vmul.f32 %v947, 0.5
        %v964 = vmul.f32 %v948, 0.5
        %v965 = vmul.f32 %v775, %v949
        %v966 = vmul.f32 %v778, %v950
        %v967 = vmul.f32 %v783, %v951
        %v968 = vmul.f32 %v786, %v952
        %v969 = vmul.f32 %v791, %v953
        %v970 = vmul.f32 %v794, %v954
        %v971 = vmul.f32 %v799, %v955
        %v972 = vmul.f32 %v802, %v956
        %v973 = vmul.f32 %v807, %v957
        %v974 = vmul.f32 %v810, %v958
        %v975 = vmul.f32 %v815, %v959
        %v976 = vmul.f32 %v818, %v960
        %v977 = vmul.f32 %v823, %v961
        %v978 = vmul.f32 %v826, %v962
        %v979 = vmul.f32 %v831, %v963
        %v980 = vmul.f32 %v834, %v964
        %v981 = vld [vmem:[#allocation3] sm:$0xff]
        %v982 = vld [vmem:[#allocation3 + $0x8] sm:$0xff]
        %v983 = vld [vmem:[#allocation3 + $0x10] sm:$0xff]
        %v984 = vld [vmem:[#allocation3 + $0x18] sm:$0xff]
        %v985 = vld [vmem:[#allocation3 + $0x20] sm:$0xff]
        %v986 = vld [vmem:[#allocation3 + $0x28] sm:$0xff]
        %v987 = vld [vmem:[#allocation3 + $0x30] sm:$0xff]
        %v988 = vld [vmem:[#allocation3 + $0x38] sm:$0xff]
        %v989 = vld [vmem:[#allocation3 + $0x40] sm:$0xff]
        %v990 = vld [vmem:[#allocation3 + $0x48] sm:$0xff]
        %v991 = vld [vmem:[#allocation3 + $0x50] sm:$0xff]
        %v992 = vld [vmem:[#allocation3 + $0x58] sm:$0xff]
        %v993 = vld [vmem:[#allocation3 + $0x60] sm:$0xff]
        %v994 = vld [vmem:[#allocation3 + $0x68] sm:$0xff]
        %v995 = vld [vmem:[#allocation3 + $0x70] sm:$0xff]
        %v996 = vld [vmem:[#allocation3 + $0x78] sm:$0xff]
        %v997 = vpack.c.bf16 %v966, %v965
        %v998 = vpack.c.bf16 %v968, %v967
        %v999 = vpack.c.bf16 %v970, %v969
        %v1000 = vpack.c.bf16 %v972, %v971
        %v1001 = vpack.c.bf16 %v974, %v973
        %v1002 = vpack.c.bf16 %v976, %v975
        %v1003 = vpack.c.bf16 %v978, %v977
        %v1004 = vpack.c.bf16 %v980, %v979
        %v1005 = vld [vmem:[%s312] sm:$0xf]
        %v1006 = vld [vmem:[%s312 + $0x4] sm:$0xf]
        %v1007 = vld [vmem:[%s312 + $0x8] sm:$0xf]
        %v1008 = vld [vmem:[%s312 + $0xc] sm:$0xf]
        %v1009 = vld [vmem:[%s312 + $0x10] sm:$0xf]
        %v1010 = vld [vmem:[%s312 + $0x14] sm:$0xf]
        %v1011 = vld [vmem:[%s312 + $0x18] sm:$0xf]
        %v1012 = vld [vmem:[%s312 + $0x1c] sm:$0xf]
        %v1013 = vld [vmem:[%s312 + $0x20] sm:$0xf]
        %v1014 = vld [vmem:[%s312 + $0x24] sm:$0xf]
        %v1015 = vld [vmem:[%s312 + $0x28] sm:$0xf]
        %v1016 = vld [vmem:[%s312 + $0x2c] sm:$0xf]
        %v1017 = vld [vmem:[%s312 + $0x30] sm:$0xf]
        %v1018 = vld [vmem:[%s312 + $0x34] sm:$0xf]
        %v1019 = vld [vmem:[%s312 + $0x38] sm:$0xf]
        %v1020 = vld [vmem:[%s312 + $0x3c] sm:$0xf]
        %v1037 = vunpack.c.l.b16 %v1005
        %v1038 = vunpack.c.l.b16 %v1006
        %v1039 = vunpack.c.l.b16 %v1007
        %v1040 = vunpack.c.l.b16 %v1008
        %v1041 = vunpack.c.l.b16 %v1009
        %v1042 = vunpack.c.l.b16 %v1010
        %v1043 = vunpack.c.l.b16 %v1011
        %v1044 = vunpack.c.l.b16 %v1012
        %v1045 = vunpack.c.l.b16 %v1013
        %v1046 = vunpack.c.l.b16 %v1014
        %v1047 = vunpack.c.l.b16 %v1015
        %v1048 = vunpack.c.l.b16 %v1016
        %v1049 = vunpack.c.l.b16 %v1017
        %v1050 = vunpack.c.l.b16 %v1018
        %v1051 = vunpack.c.l.b16 %v1019
        %v1052 = vunpack.c.l.b16 %v1020
        %v1053 = vpack.c.b16 %v1038, %v1037
        %v1054 = vpack.c.b16 %v1040, %v1039
        %v1055 = vpack.c.b16 %v1042, %v1041
        %v1056 = vpack.c.b16 %v1044, %v1043
        %v1057 = vpack.c.b16 %v1046, %v1045
        %v1058 = vpack.c.b16 %v1048, %v1047
        %v1059 = vpack.c.b16 %v1050, %v1049
        %v1060 = vpack.c.b16 %v1052, %v1051
        %1069 = vmatprep.subr.bf16.mxu0 0
        %1070 = vmatpush1.bf16.msra.mxu0 %v1053
        %1071 = vmatprep.subr.bf16.mxu0 0
        %1072 = vmatpush1.bf16.msra.mxu0 %v1054
        %1073 = vmatprep.subr.bf16.mxu0 0
        %1074 = vmatpush1.bf16.msra.mxu0 %v1055
        %1075 = vmatprep.subr.bf16.mxu0 0
        %1076 = vmatpush1.bf16.msra.mxu0 %v1056
        %1077 = vmatprep.subr.bf16.mxu0 0
        %1078 = vmatpush1.bf16.msra.mxu0 %v1057
        %1079 = vmatprep.subr.bf16.mxu0 0
        %1080 = vmatpush1.bf16.msra.mxu0 %v1058
        %1081 = vmatprep.subr.bf16.mxu0 0
        %1082 = vmatpush1.bf16.msra.mxu0 %v1059
        %1083 = vmatprep.subr.bf16.mxu0 0
        %1084 = vmatpush1.bf16.msra.mxu0 %v1060
        %1085 = vmatprep.subr.bf16.mxu0 0
        %1086 = vmatpush1.bf16.msra.mxu0 0
        %1087 = vmatprep.subr.bf16.mxu0 0
        %1088 = vmatpush1.bf16.msra.mxu0 0
        %1089 = vmatprep.subr.bf16.mxu0 0
        %1090 = vmatpush1.bf16.msra.mxu0 0
        %1091 = vmatprep.subr.bf16.mxu0 0
        %1092 = vmatpush1.bf16.msra.mxu0 0
        %1093 = vmatprep.subr.bf16.mxu0 0
        %1094 = vmatpush1.bf16.msra.mxu0 0
        %1095 = vmatprep.subr.bf16.mxu0 0
        %1096 = vmatpush1.bf16.msra.mxu0 0
        %1097 = vmatprep.subr.bf16.mxu0 0
        %1098 = vmatpush1.bf16.msra.mxu0 0
        %1099 = vmatprep.subr.bf16.mxu0 0
        %1100 = vmatpush1.bf16.msra.mxu0 0
        %1101 = vmatprep.mubr.bf16.mxu0 0
        %1102 = vmatmul.mubr.bf16.gmra.mrb[0].mxu0 %v997
        %v1103 = vpop.f32.mrb[0].mxu0
        %v1104 = vadd.f32 0.0, %v1103
        %v1105 = vpop.f32.mrb[0].mxu0
        %v1106 = vpop.f32.mrb[0].mxu0
        %v1107 = vadd.f32 0.0, %v1106
        %v1108 = vpop.f32.mrb[0].mxu0
        %1109 = vmatprep.mubr.bf16.mxu0 0
        %1110 = vmatmul.mubr.bf16.gmra.mrb[0].mxu0 %v998
        %v1111 = vpop.f32.mrb[0].mxu0
        %v1112 = vadd.f32 0.0, %v1111
        %v1113 = vpop.f32.mrb[0].mxu0
        %v1114 = vpop.f32.mrb[0].mxu0
        %v1115 = vadd.f32 0.0, %v1114
        %v1116 = vpop.f32.mrb[0].mxu0
        %1117 = vmatprep.mubr.bf16.mxu0 0
        %1118 = vmatmul.mubr.bf16.gmra.mrb[0].mxu0 %v999
        %v1119 = vpop.f32.mrb[0].mxu0
        %v1120 = vadd.f32 0.0, %v1119
        %v1121 = vpop.f32.mrb[0].mxu0
        %v1122 = vpop.f32.mrb[0].mxu0
        %v1123 = vadd.f32 0.0, %v1122
        %v1124 = vpop.f32.mrb[0].mxu0
        %1125 = vmatprep.mubr.bf16.mxu0 0
        %1126 = vmatmul.mubr.bf16.gmra.mrb[0].mxu0 %v1000
        %v1127 = vpop.f32.mrb[0].mxu0
        %v1128 = vadd.f32 0.0, %v1127
        %v1129 = vpop.f32.mrb[0].mxu0
        %v1130 = vpop.f32.mrb[0].mxu0
        %v1131 = vadd.f32 0.0, %v1130
        %v1132 = vpop.f32.mrb[0].mxu0
        %1133 = vmatprep.mubr.bf16.mxu0 0
        %1134 = vmatmul.mubr.bf16.gmra.mrb[0].mxu0 %v1001
        %v1135 = vpop.f32.mrb[0].mxu0
        %v1136 = vadd.f32 0.0, %v1135
        %v1137 = vpop.f32.mrb[0].mxu0
        %v1138 = vpop.f32.mrb[0].mxu0
        %v1139 = vadd.f32 0.0, %v1138
        %v1140 = vpop.f32.mrb[0].mxu0
        %1141 = vmatprep.mubr.bf16.mxu0 0
        %1142 = vmatmul.mubr.bf16.gmra.mrb[0].mxu0 %v1002
        %v1143 = vpop.f32.mrb[0].mxu0
        %v1144 = vadd.f32 0.0, %v1143
        %v1145 = vpop.f32.mrb[0].mxu0
        %v1146 = vpop.f32.mrb[0].mxu0
        %v1147 = vadd.f32 0.0, %v1146
        %v1148 = vpop.f32.mrb[0].mxu0
        %1149 = vmatprep.mubr.bf16.mxu0 0
        %1150 = vmatmul.mubr.bf16.gmra.mrb[0].mxu0 %v1003
        %v1151 = vpop.f32.mrb[0].mxu0
        %v1152 = vadd.f32 0.0, %v1151
        %v1153 = vpop.f32.mrb[0].mxu0
        %v1154 = vpop.f32.mrb[0].mxu0
        %v1155 = vadd.f32 0.0, %v1154
        %v1156 = vpop.f32.mrb[0].mxu0
        %1157 = vmatprep.mubr.bf16.mxu0 0
        %1158 = vmatmul.mubr.bf16.gmra.mrb[0].mxu0 %v1004
        %v1159 = vpop.f32.mrb[0].mxu0
        %v1160 = vadd.f32 0.0, %v1159
        %v1161 = vpop.f32.mrb[0].mxu0
        %v1162 = vpop.f32.mrb[0].mxu0
        %v1163 = vadd.f32 0.0, %v1162
        %v1164 = vpop.f32.mrb[0].mxu0
        %1165 = vdwg.mxu0
        %v1166 = vadd.f32 %v981, %v1104
        %v1167 = vadd.f32 %v982, %v1107
        %v1168 = vadd.f32 %v983, %v1112
        %v1169 = vadd.f32 %v984, %v1115
        %v1170 = vadd.f32 %v985, %v1120
        %v1171 = vadd.f32 %v986, %v1123
        %v1172 = vadd.f32 %v987, %v1128
        %v1173 = vadd.f32 %v988, %v1131
        %v1174 = vadd.f32 %v989, %v1136
        %v1175 = vadd.f32 %v990, %v1139
        %v1176 = vadd.f32 %v991, %v1144
        %v1177 = vadd.f32 %v992, %v1147
        %v1178 = vadd.f32 %v993, %v1152
        %v1179 = vadd.f32 %v994, %v1155
        %v1180 = vadd.f32 %v995, %v1160
        %v1181 = vadd.f32 %v996, %v1163
        %1182 = vst [vmem:[#allocation3] sm:$0xff] %v1166
        %1183 = vst [vmem:[#allocation3 + $0x8] sm:$0xff] %v1167
        %1184 = vst [vmem:[#allocation3 + $0x10] sm:$0xff] %v1168
        %1185 = vst [vmem:[#allocation3 + $0x18] sm:$0xff] %v1169
        %1186 = vst [vmem:[#allocation3 + $0x20] sm:$0xff] %v1170
        %1187 = vst [vmem:[#allocation3 + $0x28] sm:$0xff] %v1171
        %1188 = vst [vmem:[#allocation3 + $0x30] sm:$0xff] %v1172
        %1189 = vst [vmem:[#allocation3 + $0x38] sm:$0xff] %v1173
        %1190 = vst [vmem:[#allocation3 + $0x40] sm:$0xff] %v1174
        %1191 = vst [vmem:[#allocation3 + $0x48] sm:$0xff] %v1175
        %1192 = vst [vmem:[#allocation3 + $0x50] sm:$0xff] %v1176
        %1193 = vst [vmem:[#allocation3 + $0x58] sm:$0xff] %v1177
        %1194 = vst [vmem:[#allocation3 + $0x60] sm:$0xff] %v1178
        %1195 = vst [vmem:[#allocation3 + $0x68] sm:$0xff] %v1179
        %1196 = vst [vmem:[#allocation3 + $0x70] sm:$0xff] %v1180
        %1197 = vst [vmem:[#allocation3 + $0x78] sm:$0xff] %v1181
        %p1198 = scmp.eq.s32.totalorder %s28, 1
        // Predicated region
        $region61: #{tpu_custom_call.1} parent=39 // pred_check
          %p1199 = pneg %p1198
        $region62: #{tpu_custom_call.1} parent=39 // pred_check_branch
          %1201 = sbr.rel (%p1199) target = $region64
        $region63: #{tpu_custom_call.1} parent=39 // pred_region
          %v1202 = vld [vmem:[#allocation7 + $0x2] sm:$0x1]
          %v1203 = vld [vmem:[#allocation3] sm:$0xff]
          %v1204 = vld [vmem:[#allocation3 + $0x8] sm:$0xff]
          %v1205 = vld [vmem:[#allocation3 + $0x10] sm:$0xff]
          %v1206 = vld [vmem:[#allocation3 + $0x18] sm:$0xff]
          %v1207 = vld [vmem:[#allocation3 + $0x20] sm:$0xff]
          %v1208 = vld [vmem:[#allocation3 + $0x28] sm:$0xff]
          %v1209 = vld [vmem:[#allocation3 + $0x30] sm:$0xff]
          %v1210 = vld [vmem:[#allocation3 + $0x38] sm:$0xff]
          %v1211 = vld [vmem:[#allocation3 + $0x40] sm:$0xff]
          %v1212 = vld [vmem:[#allocation3 + $0x48] sm:$0xff]
          %v1213 = vld [vmem:[#allocation3 + $0x50] sm:$0xff]
          %v1214 = vld [vmem:[#allocation3 + $0x58] sm:$0xff]
          %v1215 = vld [vmem:[#allocation3 + $0x60] sm:$0xff]
          %v1216 = vld [vmem:[#allocation3 + $0x68] sm:$0xff]
          %v1217 = vld [vmem:[#allocation3 + $0x70] sm:$0xff]
          %v1218 = vld [vmem:[#allocation3 + $0x78] sm:$0xff]
          %v1219 = vlaneseq
          %v1220 = vshrl.u32 %v1219, 7
          %v1221 = vsub.s32 0, %v1220
          %v1222 = vrot.slane %v1202, %v1221
          %v1223 = vadd.f32 %v1203, %v1222
          %v1224 = vadd.f32 %v1204, %v1222
          %v1225 = vadd.f32 %v1205, %v1222
          %v1226 = vadd.f32 %v1206, %v1222
          %v1227 = vadd.f32 %v1207, %v1222
          %v1228 = vadd.f32 %v1208, %v1222
          %v1229 = vadd.f32 %v1209, %v1222
          %v1230 = vadd.f32 %v1210, %v1222
          %v1231 = vadd.f32 %v1211, %v1222
          %v1232 = vadd.f32 %v1212, %v1222
          %v1233 = vadd.f32 %v1213, %v1222
          %v1234 = vadd.f32 %v1214, %v1222
          %v1235 = vadd.f32 %v1215, %v1222
          %v1236 = vadd.f32 %v1216, %v1222
          %v1237 = vadd.f32 %v1217, %v1222
          %v1238 = vadd.f32 %v1218, %v1222
          %1239 = vst [vmem:[%s351] sm:$0xff] %v1223
          %1240 = vst [vmem:[%s351 + $0x8] sm:$0xff] %v1224
          %1241 = vst [vmem:[%s351 + $0x10] sm:$0xff] %v1225
          %1242 = vst [vmem:[%s351 + $0x18] sm:$0xff] %v1226
          %1243 = vst [vmem:[%s351 + $0x20] sm:$0xff] %v1227
          %1244 = vst [vmem:[%s351 + $0x28] sm:$0xff] %v1228
          %1245 = vst [vmem:[%s351 + $0x30] sm:$0xff] %v1229
          %1246 = vst [vmem:[%s351 + $0x38] sm:$0xff] %v1230
          %1247 = vst [vmem:[%s351 + $0x40] sm:$0xff] %v1231
          %1248 = vst [vmem:[%s351 + $0x48] sm:$0xff] %v1232
          %1249 = vst [vmem:[%s351 + $0x50] sm:$0xff] %v1233
          %1250 = vst [vmem:[%s351 + $0x58] sm:$0xff] %v1234
          %1251 = vst [vmem:[%s351 + $0x60] sm:$0xff] %v1235
          %1252 = vst [vmem:[%s351 + $0x68] sm:$0xff] %v1236
          %1253 = vst [vmem:[%s351 + $0x70] sm:$0xff] %v1237
          %1254 = vst [vmem:[%s351 + $0x78] sm:$0xff] %v1238
        $region64: #{tpu_custom_call.1} parent=39 // pred_fallthru
          _
        %s1255 = sand.u32 %s168, 1
        %s1256 = scalar_lea.sflag [#allocation6], %s1255
        %s1257 = sand.u32 %s168, 1
        %s1258 = smul.addr %s1257, 128
        %s1259 = scalar_lea.vmem [#allocation11], %s1258
        // Predicated region
        $region65: #{tpu_custom_call.1} parent=39 // pred_check
          %p1260 = pneg %p178
        $region66: #{tpu_custom_call.1} parent=39 // pred_check_branch
          %1262 = sbr.rel (%p1260) target = $region68
        $region67: #{tpu_custom_call.1} parent=39 // pred_region
          %s1263 = smul.u32 16, %s27
          %s1265 = ssub.s32 2048, 2048
          %1266 = vsyncadd %s1256, %s1265
          %s1267 = smul.addr %s1263, 128
          %s1268 = scalar_lea.hbm %s5, %s1267
          %s1269 = sshll.u32 %s1259, 4
          %s1270 = int_to_ptr.vmem [resolvable:$true] %s1269
          %1275 = dma.vmem_to_hbm [thread:$0]  %s1270, 2048, %s1268, %s1256, 128, 128, 8
        $region68: #{tpu_custom_call.1} parent=39 // pred_fallthru
          _
      $region40: #{tpu_custom_call.1} parent=5 // pred_fallthru
        _
      %p1276 = scmp.le.s32.totalorder 2, %s18
      // Predicated region
      $region69: #{tpu_custom_call.1} parent=5 // pred_check
        %p1277 = pneg %p1276
      $region70: #{tpu_custom_call.1} parent=5 // pred_check_branch
        %1279 = sbr.rel (%p1277) target = $region72
      $region71: #{tpu_custom_call.1} parent=5 // pred_region
        %s1280 = ssub.s32 %s18, 2
        // Predicated region
        $region73: #{tpu_custom_call.1} parent=71 // pred_check
          %p1281 = pneg %p184
        $region74: #{tpu_custom_call.1} parent=71 // pred_check_branch
          %1283 = sbr.rel (%p1281) target = $region76
        $region75: #{tpu_custom_call.1} parent=71 // pred_region
          %s1284 = sand.u32 %s169, 1
          %s1285 = scalar_lea.sflag [#allocation6], %s1284
          %s1286 = sand.u32 %s169, 1
          %s1287 = smul.addr %s1286, 128
          %s1288 = scalar_lea.vmem [#allocation11], %s1287
          %1289 = dma.done %s1285, 2048
        $region76: #{tpu_custom_call.1} parent=71 // pred_fallthru
          _
      $region72: #{tpu_custom_call.1} parent=5 // pred_fallthru
        _
    $region6: #{tpu_custom_call.1} parent=1 // loop_footer
      %s22 = sadd.s32 1, %s18
    $region7: #{tpu_custom_call.1} parent=1 // loop_footer_branch
      %17 = sbr.rel target = $region3
    $region8: #{tpu_custom_call.1} parent=1 // loop_exit
      _
    %1290 = vsyncpa [#allocation5], 1
    %s1291 = scalar_lea.sflag [#allocation5], 1
    %1292 = vsyncpa %s1291, 1
    %1293 = vsyncpa [#allocation8], 1
    %1294 = vsyncpa [#allocation6], 1
    %s1295 = scalar_lea.sflag [#allocation6], 1
    %1296 = vsyncpa %s1295, 1

</llo_original>
